<compile_context>
chip_gen: v5e
topology: v5e:2x2
jax: 0.10.0
libtpu: 0.0.40
codegen_flags: <defaults>
</compile_context>

<pallas_src>
import functools

import jax
import jax.numpy as jnp
from jax import lax
from jax.experimental import pallas as pl
from jax.experimental.pallas import tpu as pltpu


def _smooth_ce_kernel(tgt_ref, *refs, eps: float, num_heads: int):
    """Per-sample label-smoothed cross entropy for one batch tile.

    tgt_ref:            [bB, 1] i32 class indices
    refs[:num_heads]:   P logit refs, each [bB, C] (native dtype)
    refs[num_heads]:    out ref [bB, P] f32 per-sample loss
    """
    logit_refs = refs[:num_heads]
    out_ref = refs[num_heads]

    bB = tgt_ref.shape[0]
    C = logit_refs[0].shape[1]

    # One-hot *mask* (bool) built once and reused for every head.
    cls_ids = lax.broadcasted_iota(jnp.int32, (bB, C), 1)     # [bB, C]
    onehot_mask = cls_ids == tgt_ref[...]                     # [bB, C] bool

    if eps > 0.0:
        coef_t = 1.0 - eps - eps / (C - 1)
        coef_all = eps / (C - 1)
    else:
        coef_t = 1.0
        coef_all = 0.0

    for h in range(num_heads):
        x = logit_refs[h][...].astype(jnp.float32)            # [bB, C]
        m = jnp.max(x, axis=-1, keepdims=True)                # [bB, 1]
        lse = jnp.log(jnp.sum(jnp.exp(x - m), axis=-1, keepdims=True))
        z_t = jnp.sum(jnp.where(onehot_mask, x, 0.0),
                      axis=-1, keepdims=True)                 # target logit
        loss = (m + lse) - coef_t * z_t                       # [bB, 1]
        if eps > 0.0:
            sum_z = jnp.sum(x, axis=-1, keepdims=True)
            loss = loss - coef_all * sum_z
        out_ref[:, h:h + 1] = loss


def smooth_ce_per_sample(heads, targets_b, eps, *, block_b=None):
    """Per-sample smoothed CE for P prediction heads.

    heads:      list of P arrays [B, C] (any float dtype; not pre-cast)
    targets_b:  [B] integer class indices
    returns:    [B, P] float32 per-sample losses
    """
    heads = [jnp.asarray(h) for h in heads]
    B, C = heads[0].shape
    P = len(heads)
    tgt = jnp.asarray(targets_b).reshape(B, 1).astype(jnp.int32)

    if block_b is None:
        # ~6 MiB budget for the double-buffered input blocks (+ output),
        # safe under the default scoped VMEM limit on v5e/v6e/v7x.
        itemsize = max(h.dtype.itemsize for h in heads)
        budget = 6 * 1024 * 1024
        per_row = 2 * P * C * itemsize + 2 * P * 4 + 8
        block_b = max(8, (budget // per_row) // 8 * 8)
    if block_b >= B:
        block_b = B
    bB = block_b
    grid = (pl.cdiv(B, bB),)

    kernel = functools.partial(_smooth_ce_kernel, eps=float(eps),
                               num_heads=P)
    in_specs = [pl.BlockSpec((bB, 1), lambda i: (i, 0))]          # targets
    in_specs += [pl.BlockSpec((bB, C), lambda i: (i, 0))
                 for _ in range(P)]                               # heads
    out_spec = pl.BlockSpec((bB, P), lambda i: (i, 0))

    return pl.pallas_call(
        kernel,
        out_shape=jax.ShapeDtypeStruct((B, P), jnp.float32),
        grid=grid,
        in_specs=in_specs,
        out_specs=out_spec,
        compiler_params=pltpu.CompilerParams(
            dimension_semantics=("parallel",),
            vmem_limit_bytes=32 * 1024 * 1024),
    )(tgt, *heads)


class ClsLossJax:
    """JAX/Pallas port of ClsLoss for config {'name': 'ce', ...}."""

    def __init__(self, config):
        assert config["name"] == "ce", "only 'ce' loss implemented"
        self.aux_loss_weight = config["aux_loss_weight"]
        self.ousm_k = config.get("ousm_k", 0)
        self.eps = config.get("smoothing", 0.0)
        assert self.ousm_k == 0, "ousm_k > 0 not implemented"

    def __call__(self, pred, pred_aux, y, y_aux):
        # prepare(): for 'ce', y is squeezed to class indices [B].
        # (reshape(-1) instead of squeeze() so batch=1 is handled correctly)
        y = jnp.asarray(y).reshape(-1)

        use_aux = (self.aux_loss_weight > 0
                   and isinstance(pred_aux, (list, tuple))
                   and len(pred_aux) > 0)
        heads = [pred] + list(pred_aux) if use_aux else [pred]

        per_sample = smooth_ce_per_sample(heads, y, self.eps)   # [B, P]

        loss = jnp.mean(per_sample[:, 0])
        if not self.aux_loss_weight > 0:
            return loss

        w_aux_tot = 0.0
        loss_aux_tot = 0.0
        if use_aux:
            for layer in range(len(pred_aux)):
                w = self.aux_loss_weight * (layer + 1)
                loss_aux_tot = loss_aux_tot + w * jnp.mean(
                    per_sample[:, layer + 1])
                w_aux_tot = w_aux_tot + w
        return (1.0 - w_aux_tot) * loss + w_aux_tot * loss_aux_tot


def _ref_smooth_ce(logits, tgt, eps):
    """Pure-JAX reference (mirrors SmoothCrossEntropyLoss.forward)."""
    logits = logits.astype(jnp.float32)
    lp = jax.nn.log_softmax(logits, axis=1)
    oh = jax.nn.one_hot(tgt, logits.shape[1], dtype=jnp.float32)
    if eps > 0:
        oh = oh * (1 - eps) + (1 - oh) * eps / (logits.shape[1] - 1)
    return (-oh * lp).sum(-1)


if __name__ == "__main__":
    B, C = 8, 32          # batch, n_classes
    n_aux = 2             # number of auxiliary prediction heads

    config = {
        "name": "ce",
        "aux_loss_weight": 0.1,
        "ousm_k": 0,
        "smoothing": 0.1,
    }

    key = jax.random.PRNGKey(0)
    k_pred, k_aux, k_y = jax.random.split(key, 3)
    pred = jax.random.normal(k_pred, (B, C), dtype=jnp.float32)
    pred_aux = [
        jax.random.normal(jax.random.fold_in(k_aux, i), (B, C),
                          dtype=jnp.float32)
        for i in range(n_aux)
    ]
    y = jax.random.randint(k_y, (B, 1), 0, C, dtype=jnp.int32)   # [bs x 1]
    y_aux = []  # unused by this config's forward

    loss_fn = ClsLossJax(config)
    out = loss_fn(pred, pred_aux, y, y_aux)
    jax.block_until_ready(out)

    # --- check 1: full ClsLoss forward vs pure-JAX reference ---------------
    y_sq = y.reshape(-1)
    ref_loss = jnp.mean(_ref_smooth_ce(pred, y_sq, config["smoothing"]))
    w_tot, aux_tot = 0.0, 0.0
    for layer, p in enumerate(pred_aux):
        w = config["aux_loss_weight"] * (layer + 1)
        aux_tot += w * jnp.mean(_ref_smooth_ce(p, y_sq, config["smoothing"]))
        w_tot += w
    ref = (1 - w_tot) * ref_loss + w_tot * aux_tot
    assert jnp.allclose(out, ref, atol=1e-5, rtol=1e-4), (out, ref)

    # --- check 2: batch-tiled grid with a partial last block ---------------
    B2, P2, bB2 = 20, 2, 16
    k1, k2, k3 = jax.random.split(jax.random.PRNGKey(1), 3)
    h0 = jax.random.normal(k1, (B2, C), dtype=jnp.float32)
    h1 = jax.random.normal(k2, (B2, C), dtype=jnp.float32)
    y2 = jax.random.randint(k3, (B2,), 0, C, dtype=jnp.int32)
    per = smooth_ce_per_sample([h0, h1], y2, 0.1, block_b=bB2)
    jax.block_until_ready(per)
    ref0 = _ref_smooth_ce(h0, y2, 0.1)
    ref1 = _ref_smooth_ce(h1, y2, 0.1)
    assert jnp.allclose(per[:, 0], ref0, atol=1e-5, rtol=1e-4)
    assert jnp.allclose(per[:, 1], ref1, atol=1e-5, rtol=1e-4)

    print("KERNEL_OK")
</pallas_src>

<mosaic_0001>
module attributes {stable_mosaic.version = 11 : i64} {
  func.func @_smooth_ce_kernel(%arg0: i32, %arg1: memref<8x1xi32, #tpu.memory_space<vmem>>, %arg2: memref<8x32xf32, #tpu.memory_space<vmem>>, %arg3: memref<8x32xf32, #tpu.memory_space<vmem>>, %arg4: memref<8x32xf32, #tpu.memory_space<vmem>>, %arg5: memref<8x3xf32, #tpu.memory_space<vmem>>) attributes {dimension_semantics = [#tpu.dimension_semantics<parallel>], iteration_bounds = array<i64: 1>, scalar_prefetch = 0 : i64, scratch_operands = 0 : i64, tpu.core_type = #tpu.core_type<tc>, window_params = [{transform_indices = @transform_0, window_bounds = array<i64: 8, 1>}, {transform_indices = @transform_1, window_bounds = array<i64: 8, 32>}, {transform_indices = @transform_2, window_bounds = array<i64: 8, 32>}, {transform_indices = @transform_3, window_bounds = array<i64: 8, 32>}, {transform_indices = @transform_4, window_bounds = array<i64: 8, 3>}]} {
    %0 = tpu.iota {dimensions = array<i32: 1>} : vector<8x32xi32>
    %c0 = arith.constant 0 : index
    %c0_0 = arith.constant 0 : index
    %1 = vector.load %arg1[%c0, %c0_0] : memref<8x1xi32, #tpu.memory_space<vmem>>, vector<8x1xi32>
    %2 = vector.broadcast %1 : vector<8x1xi32> to vector<8x32xi32>
    %3 = arith.cmpi eq, %0, %2 : vector<8x32xi32>
    %c0_1 = arith.constant 0 : index
    %c0_2 = arith.constant 0 : index
    %4 = vector.load %arg2[%c0_1, %c0_2] : memref<8x32xf32, #tpu.memory_space<vmem>>, vector<8x32xf32>
    %cst = arith.constant dense<0xFF800000> : vector<8xf32>
    %5 = vector.multi_reduction <maximumf>, %4, %cst [1] : vector<8x32xf32> to vector<8xf32>
    %6 = vector.shape_cast %5 : vector<8xf32> to vector<8x1xf32>
    %7 = vector.broadcast %6 : vector<8x1xf32> to vector<8x32xf32>
    %8 = arith.subf %4, %7 : vector<8x32xf32>
    %9 = math.exp %8 : vector<8x32xf32>
    %cst_3 = arith.constant dense<0.000000e+00> : vector<8xf32>
    %10 = vector.multi_reduction <add>, %9, %cst_3 [1] : vector<8x32xf32> to vector<8xf32>
    %11 = vector.shape_cast %10 : vector<8xf32> to vector<8x1xf32>
    %12 = math.log %11 : vector<8x1xf32>
    %cst_4 = arith.constant 0.000000e+00 : f32
    %13 = vector.broadcast %cst_4 : f32 to vector<8x32xf32>
    %14 = arith.select %3, %4, %13 : vector<8x32xi1>, vector<8x32xf32>
    %cst_5 = arith.constant dense<0.000000e+00> : vector<8xf32>
    %15 = vector.multi_reduction <add>, %14, %cst_5 [1] : vector<8x32xf32> to vector<8xf32>
    %16 = vector.shape_cast %15 : vector<8xf32> to vector<8x1xf32>
    %17 = arith.addf %6, %12 : vector<8x1xf32>
    %cst_6 = arith.constant 0.896774172 : f32
    %18 = vector.broadcast %cst_6 : f32 to vector<8x1xf32>
    %19 = arith.mulf %18, %16 : vector<8x1xf32>
    %20 = arith.subf %17, %19 : vector<8x1xf32>
    %cst_7 = arith.constant dense<0.000000e+00> : vector<8xf32>
    %21 = vector.multi_reduction <add>, %4, %cst_7 [1] : vector<8x32xf32> to vector<8xf32>
    %22 = vector.shape_cast %21 : vector<8xf32> to vector<8x1xf32>
    %cst_8 = arith.constant 0.0032258064 : f32
    %23 = vector.broadcast %cst_8 : f32 to vector<8x1xf32>
    %24 = arith.mulf %23, %22 : vector<8x1xf32>
    %25 = arith.subf %20, %24 : vector<8x1xf32>
    %c0_9 = arith.constant 0 : index
    %c0_10 = arith.constant 0 : index
    %26 = vector.load %arg5[%c0_9, %c0_10] : memref<8x3xf32, #tpu.memory_space<vmem>>, vector<8x1xf32>
    tpu.vector_store %arg5[%c0_9, %c0_10], %25 {strides = array<i32>} : memref<8x3xf32, #tpu.memory_space<vmem>>, vector<8x1xf32>,
    %c0_11 = arith.constant 0 : index
    %c0_12 = arith.constant 0 : index
    %27 = vector.load %arg3[%c0_11, %c0_12] : memref<8x32xf32, #tpu.memory_space<vmem>>, vector<8x32xf32>
    %cst_13 = arith.constant dense<0xFF800000> : vector<8xf32>
    %28 = vector.multi_reduction <maximumf>, %27, %cst_13 [1] : vector<8x32xf32> to vector<8xf32>
    %29 = vector.shape_cast %28 : vector<8xf32> to vector<8x1xf32>
    %30 = vector.broadcast %29 : vector<8x1xf32> to vector<8x32xf32>
    %31 = arith.subf %27, %30 : vector<8x32xf32>
    %32 = math.exp %31 : vector<8x32xf32>
    %cst_14 = arith.constant dense<0.000000e+00> : vector<8xf32>
    %33 = vector.multi_reduction <add>, %32, %cst_14 [1] : vector<8x32xf32> to vector<8xf32>
    %34 = vector.shape_cast %33 : vector<8xf32> to vector<8x1xf32>
    %35 = math.log %34 : vector<8x1xf32>
    %cst_15 = arith.constant 0.000000e+00 : f32
    %36 = vector.broadcast %cst_15 : f32 to vector<8x32xf32>
    %37 = arith.select %3, %27, %36 : vector<8x32xi1>, vector<8x32xf32>
    %cst_16 = arith.constant dense<0.000000e+00> : vector<8xf32>
    %38 = vector.multi_reduction <add>, %37, %cst_16 [1] : vector<8x32xf32> to vector<8xf32>
    %39 = vector.shape_cast %38 : vector<8xf32> to vector<8x1xf32>
    %40 = arith.addf %29, %35 : vector<8x1xf32>
    %cst_17 = arith.constant 0.896774172 : f32
    %41 = vector.broadcast %cst_17 : f32 to vector<8x1xf32>
    %42 = arith.mulf %41, %39 : vector<8x1xf32>
    %43 = arith.subf %40, %42 : vector<8x1xf32>
    %cst_18 = arith.constant dense<0.000000e+00> : vector<8xf32>
    %44 = vector.multi_reduction <add>, %27, %cst_18 [1] : vector<8x32xf32> to vector<8xf32>
    %45 = vector.shape_cast %44 : vector<8xf32> to vector<8x1xf32>
    %cst_19 = arith.constant 0.0032258064 : f32
    %46 = vector.broadcast %cst_19 : f32 to vector<8x1xf32>
    %47 = arith.mulf %46, %45 : vector<8x1xf32>
    %48 = arith.subf %43, %47 : vector<8x1xf32>
    %c0_20 = arith.constant 0 : index
    %c1 = arith.constant 1 : index
    %49 = vector.load %arg5[%c0_20, %c1] : memref<8x3xf32, #tpu.memory_space<vmem>>, vector<8x1xf32>
    tpu.vector_store %arg5[%c0_20, %c1], %48 {strides = array<i32>} : memref<8x3xf32, #tpu.memory_space<vmem>>, vector<8x1xf32>,
    %c0_21 = arith.constant 0 : index
    %c0_22 = arith.constant 0 : index
    %50 = vector.load %arg4[%c0_21, %c0_22] : memref<8x32xf32, #tpu.memory_space<vmem>>, vector<8x32xf32>
    %cst_23 = arith.constant dense<0xFF800000> : vector<8xf32>
    %51 = vector.multi_reduction <maximumf>, %50, %cst_23 [1] : vector<8x32xf32> to vector<8xf32>
    %52 = vector.shape_cast %51 : vector<8xf32> to vector<8x1xf32>
    %53 = vector.broadcast %52 : vector<8x1xf32> to vector<8x32xf32>
    %54 = arith.subf %50, %53 : vector<8x32xf32>
    %55 = math.exp %54 : vector<8x32xf32>
    %cst_24 = arith.constant dense<0.000000e+00> : vector<8xf32>
    %56 = vector.multi_reduction <add>, %55, %cst_24 [1] : vector<8x32xf32> to vector<8xf32>
    %57 = vector.shape_cast %56 : vector<8xf32> to vector<8x1xf32>
    %58 = math.log %57 : vector<8x1xf32>
    %cst_25 = arith.constant 0.000000e+00 : f32
    %59 = vector.broadcast %cst_25 : f32 to vector<8x32xf32>
    %60 = arith.select %3, %50, %59 : vector<8x32xi1>, vector<8x32xf32>
    %cst_26 = arith.constant dense<0.000000e+00> : vector<8xf32>
    %61 = vector.multi_reduction <add>, %60, %cst_26 [1] : vector<8x32xf32> to vector<8xf32>
    %62 = vector.shape_cast %61 : vector<8xf32> to vector<8x1xf32>
    %63 = arith.addf %52, %58 : vector<8x1xf32>
    %cst_27 = arith.constant 0.896774172 : f32
    %64 = vector.broadcast %cst_27 : f32 to vector<8x1xf32>
    %65 = arith.mulf %64, %62 : vector<8x1xf32>
    %66 = arith.subf %63, %65 : vector<8x1xf32>
    %cst_28 = arith.constant dense<0.000000e+00> : vector<8xf32>
    %67 = vector.multi_reduction <add>, %50, %cst_28 [1] : vector<8x32xf32> to vector<8xf32>
    %68 = vector.shape_cast %67 : vector<8xf32> to vector<8x1xf32>
    %cst_29 = arith.constant 0.0032258064 : f32
    %69 = vector.broadcast %cst_29 : f32 to vector<8x1xf32>
    %70 = arith.mulf %69, %68 : vector<8x1xf32>
    %71 = arith.subf %66, %70 : vector<8x1xf32>
    %c0_30 = arith.constant 0 : index
    %c2 = arith.constant 2 : index
    %72 = vector.load %arg5[%c0_30, %c2] : memref<8x3xf32, #tpu.memory_space<vmem>>, vector<8x1xf32>
    tpu.vector_store %arg5[%c0_30, %c2], %71 {strides = array<i32>} : memref<8x3xf32, #tpu.memory_space<vmem>>, vector<8x1xf32>,
    return
  }
  func.func @transform_0(%arg0: i32) -> (i32, i32) {
    %c0_i32 = arith.constant 0 : i32
    %c0_i32_0 = arith.constant 0 : i32
    return %arg0, %c0_i32 : i32, i32
  }
  func.func @transform_1(%arg0: i32) -> (i32, i32) {
    %c0_i32 = arith.constant 0 : i32
    %c0_i32_0 = arith.constant 0 : i32
    return %arg0, %c0_i32 : i32, i32
  }
  func.func @transform_2(%arg0: i32) -> (i32, i32) {
    %c0_i32 = arith.constant 0 : i32
    %c0_i32_0 = arith.constant 0 : i32
    return %arg0, %c0_i32 : i32, i32
  }
  func.func @transform_3(%arg0: i32) -> (i32, i32) {
    %c0_i32 = arith.constant 0 : i32
    %c0_i32_0 = arith.constant 0 : i32
    return %arg0, %c0_i32 : i32, i32
  }
  func.func @transform_4(%arg0: i32) -> (i32, i32) {
    %c0_i32 = arith.constant 0 : i32
    %c0_i32_0 = arith.constant 0 : i32
    return %arg0, %c0_i32 : i32, i32
  }
}

</mosaic_0001>

<llo_original>
// kernel: tpu_custom_call.1
$region0: #{tpu_custom_call.1}
  #allocation0 [shape = 'u32[]', space=smem, size = 0x4, offset = 0x4, fixed_abs, tag = 'smem constant byte address 0x4 - core index']
  #allocation1 [shape = 'u32[72,128]{1,0:T(1,128)}', space=vmem, size = 0x9000, scoped, tag = 'internal scratch']
  %s0 = inlined_call_operand.vmem [shape: s32[8,1], index: 0, kind: input, shape index: {}]
  %s1 = inlined_call_operand.vmem [shape: f32[8,32], index: 1, kind: input, shape index: {}]
  %s2 = inlined_call_operand.hbm [shape: f32[8,32], index: 2, kind: input, shape index: {}]
  %s3 = inlined_call_operand.hbm [shape: f32[8,32], index: 3, kind: input, shape index: {}]
  %s4 = inlined_call_operand.vmem [shape: f32[8,3], index: 4, kind: output, shape index: {}]
  %s5 = sld [smem:[#allocation0]]
  $region34: #{tpu_custom_call.1} parent=0
    _
  %s7 = ssub.s32 1, %s5
  %s8 = scalar_select 0, %s7, %s5
  $region1: #{tpu_custom_call.1} parent=0
    #allocation2 [shape = 'u8[4096]{0}', space=vmem, size = 0x1000, scoped, tag = 'input window, operand 2, single buffered']
    #allocation3 [shape = 's32[1]{0}', space=sflag, size = 0x4, scoped, tag = 'scoped memory for tpu_custom_call.1']
    #allocation4 [shape = 'u8[4096]{0}', space=vmem, size = 0x1000, scoped, tag = 'input window, operand 3, single buffered']
    #allocation5 [shape = 's32[1]{0}', space=sflag, size = 0x4, scoped, tag = 'scoped memory for tpu_custom_call.1']
    %9 = vsyncpa [#allocation3], 0
    %10 = vsyncpa [#allocation5], 0
    // Predicated region
    $region2: #{tpu_custom_call.1} parent=1 // pred_check
      _
    $region3: #{tpu_custom_call.1} parent=1 // pred_check_branch
      %12 = sbr.rel (0) target = $region5
    $region4: #{tpu_custom_call.1} parent=1 // pred_region
      _
    $region5: #{tpu_custom_call.1} parent=1 // pred_fallthru
      _
    // Predicated region
    $region6: #{tpu_custom_call.1} parent=1 // pred_check
      _
    $region7: #{tpu_custom_call.1} parent=1 // pred_check_branch
      %14 = sbr.rel (0) target = $region9
    $region8: #{tpu_custom_call.1} parent=1 // pred_region
      _
    $region9: #{tpu_custom_call.1} parent=1 // pred_fallthru
      _
    // Predicated region
    $region10: #{tpu_custom_call.1} parent=1 // pred_check
      _
    $region11: #{tpu_custom_call.1} parent=1 // pred_check_branch
      %16 = sbr.rel (0) target = $region13
    $region12: #{tpu_custom_call.1} parent=1 // pred_region
      %18 = vsyncadd [#allocation3], 0
      %s20 = sshll.u32 %s2, 4
      %s21 = int_to_ptr.hbm [resolvable:$true] %s20
      %s22 = sshll.u32 [#allocation2], 4
      %s23 = int_to_ptr.vmem [resolvable:$true] %s22
      %25 = dma.hbm_to_vmem [thread:$0]  %s21, 128, %s23, [#allocation3]
    $region13: #{tpu_custom_call.1} parent=1 // pred_fallthru
      _
    // Predicated region
    $region14: #{tpu_custom_call.1} parent=1 // pred_check
      _
    $region15: #{tpu_custom_call.1} parent=1 // pred_check_branch
      %27 = sbr.rel (0) target = $region17
    $region16: #{tpu_custom_call.1} parent=1 // pred_region
      %29 = vsyncadd [#allocation5], 0
      %s31 = sshll.u32 %s3, 4
      %s32 = int_to_ptr.hbm [resolvable:$true] %s31
      %s33 = sshll.u32 [#allocation4], 4
      %s34 = int_to_ptr.vmem [resolvable:$true] %s33
      %36 = dma.hbm_to_vmem [thread:$0]  %s32, 128, %s34, [#allocation5]
    $region17: #{tpu_custom_call.1} parent=1 // pred_fallthru
      _
    // Predicated region
    $region18: #{tpu_custom_call.1} parent=1 // pred_check
      _
    $region19: #{tpu_custom_call.1} parent=1 // pred_check_branch
      %38 = sbr.rel (0) target = $region21
    $region20: #{tpu_custom_call.1} parent=1 // pred_region
      %40 = dma.done [#allocation3], 128
    $region21: #{tpu_custom_call.1} parent=1 // pred_fallthru
      _
    // Predicated region
    $region22: #{tpu_custom_call.1} parent=1 // pred_check
      _
    $region23: #{tpu_custom_call.1} parent=1 // pred_check_branch
      %42 = sbr.rel (0) target = $region25
    $region24: #{tpu_custom_call.1} parent=1 // pred_region
      %44 = dma.done [#allocation5], 128
    $region25: #{tpu_custom_call.1} parent=1 // pred_fallthru
      _
    %v45 = vlaneseq
    %v46 = vand.u32 %v45, 127
    %v47 = vld [vmem:[%s0] sm:$0xff]
    %48 = vset.pattern.permute.xlu0 0
    %49 = vperm.xlu0 %48, %v47
    %v50 = vpop.permute.xlu0 %49
    %vm51 = vcmp.eq.s32.totalorder %v46, %v50
    %v52 = vld [vmem:[%s1] sm:$0xff]
    %vm53 = vcmask 261120
    %v54 = vsel %vm53, %v52, -inf
    %55 = vmax.xlane.f32.xlu0 %v54
    %v56 = vpop.xlane.xlu0 %55
    %v57 = vsub.f32 %v52, %v56
    %v58 = vmul.f32 %v57, 1.442695
    %v59 = vpow.pop %v58
    %v60 = vsel %vm53, %v59, 0.0
    %61 = vadd.xlane.f32.xlu0 %v60
    %v62 = vpop.xlane.xlu0 %61
    %v63 = vlog2.pop %v62
    %v64 = vmul.f32 %v63, 0.6931472
    %v65 = vsel %vm51, %v52, 0.0
    %v66 = vsel %vm53, %v65, 0.0
    %67 = vadd.xlane.f32.xlu0 %v66
    %v68 = vpop.xlane.xlu0 %67
    %v69 = vadd.f32 %v56, %v64
    %v70 = vmul.f32 %v68, 0.8967742
    %v71 = vsub.f32 %v69, %v70
    %v72 = vsel %vm53, %v52, 0.0
    %73 = vadd.xlane.f32.xlu0 %v72
    %v74 = vpop.xlane.xlu0 %73
    %v75 = vmul.f32 %v74, 0.0032258064
    %v76 = vsub.f32 %v71, %v75
    %vm77 = vcmask 7168
    %78 = vst.msk [vmem:[%s4] sm:$0xff] %vm77, %v76
    %v79 = vld [vmem:[#allocation2] sm:$0xff]
    %v80 = vsel %vm53, %v79, -inf
    %81 = vmax.xlane.f32.xlu0 %v80
    %v82 = vpop.xlane.xlu0 %81
    %v83 = vsub.f32 %v79, %v82
    %v84 = vmul.f32 %v83, 1.442695
    %v85 = vpow.pop %v84
    %v86 = vsel %vm53, %v85, 0.0
    %87 = vadd.xlane.f32.xlu0 %v86
    %v88 = vpop.xlane.xlu0 %87
    %v89 = vlog2.pop %v88
    %v90 = vmul.f32 %v89, 0.6931472
    %v91 = vsel %vm51, %v79, 0.0
    %v92 = vsel %vm53, %v91, 0.0
    %93 = vadd.xlane.f32.xlu0 %v92
    %v94 = vpop.xlane.xlu0 %93
    %v95 = vadd.f32 %v82, %v90
    %v96 = vmul.f32 %v94, 0.8967742
    %v97 = vsub.f32 %v95, %v96
    %v98 = vsel %vm53, %v79, 0.0
    %99 = vadd.xlane.f32.xlu0 %v98
    %v100 = vpop.xlane.xlu0 %99
    %v101 = vmul.f32 %v100, 0.0032258064
    %v102 = vsub.f32 %v97, %v101
    %vm103 = vcmask 15368
    %104 = vst.msk [vmem:[%s4] sm:$0xff] %vm103, %v102
    %v105 = vld [vmem:[#allocation4] sm:$0xff]
    %v106 = vsel %vm53, %v105, -inf
    %107 = vmax.xlane.f32.xlu0 %v106
    %v108 = vpop.xlane.xlu0 %107
    %v109 = vsub.f32 %v105, %v108
    %v110 = vmul.f32 %v109, 1.442695
    %v111 = vpow.pop %v110
    %v112 = vsel %vm53, %v111, 0.0
    %113 = vadd.xlane.f32.xlu0 %v112
    %v114 = vpop.xlane.xlu0 %113
    %v115 = vlog2.pop %v114
    %v116 = vmul.f32 %v115, 0.6931472
    %v117 = vsel %vm51, %v105, 0.0
    %v118 = vsel %vm53, %v117, 0.0
    %119 = vadd.xlane.f32.xlu0 %v118
    %v120 = vpop.xlane.xlu0 %119
    %v121 = vadd.f32 %v108, %v116
    %v122 = vmul.f32 %v120, 0.8967742
    %v123 = vsub.f32 %v121, %v122
    %v124 = vsel %vm53, %v105, 0.0
    %125 = vadd.xlane.f32.xlu0 %v124
    %v126 = vpop.xlane.xlu0 %125
    %v127 = vmul.f32 %v126, 0.0032258064
    %v128 = vsub.f32 %v123, %v127
    %vm129 = vcmask 23568
    %130 = vst.msk [vmem:[%s4] sm:$0xff] %vm129, %v128
    // Predicated region
    $region26: #{tpu_custom_call.1} parent=1 // pred_check
      _
    $region27: #{tpu_custom_call.1} parent=1 // pred_check_branch
      %132 = sbr.rel (0) target = $region29
    $region28: #{tpu_custom_call.1} parent=1 // pred_region
      _
    $region29: #{tpu_custom_call.1} parent=1 // pred_fallthru
      _
    // Predicated region
    $region30: #{tpu_custom_call.1} parent=1 // pred_check
      _
    $region31: #{tpu_custom_call.1} parent=1 // pred_check_branch
      %134 = sbr.rel (0) target = $region33
    $region32: #{tpu_custom_call.1} parent=1 // pred_region
      _
    $region33: #{tpu_custom_call.1} parent=1 // pred_fallthru
      _
    %135 = vsyncpa [#allocation3], 1
    %136 = vsyncpa [#allocation5], 1

</llo_original>
